<compile_context>
chip_gen: v5e
topology: v5e:2x2
jax: 0.10.0
libtpu: 0.0.40
codegen_flags: <defaults>
</compile_context>

<pallas_src>
import functools

import jax
import jax.numpy as jnp
from jax.experimental import pallas as pl
from jax.experimental.pallas import tpu as pltpu


def _mlp_kernel(f_ref, p_ref, g_ref, c_ref,
                w1_0_ref, w1_1_ref, w1_2_ref, w1_3_ref,
                b1_ref, w2_ref, b2_ref, o_ref, *, compute_dtype):
    # Split-K first layer: each activation tile is cast to bf16 in VMEM right
    # before its MXU pass (no wrapper cast, no in-kernel lane concat).
    h = jnp.dot(f_ref[...].astype(compute_dtype), w1_0_ref[...],
                preferred_element_type=jnp.float32)
    h += jnp.dot(p_ref[...].astype(compute_dtype), w1_1_ref[...],
                 preferred_element_type=jnp.float32)
    h += jnp.dot(g_ref[...].astype(compute_dtype), w1_2_ref[...],
                 preferred_element_type=jnp.float32)
    h += jnp.dot(c_ref[...].astype(compute_dtype), w1_3_ref[...],
                 preferred_element_type=jnp.float32)
    h = jnp.maximum(h + b1_ref[...], 0.0)              # bias + ReLU in f32 (v5e-friendly)
    o = jnp.dot(h.astype(compute_dtype), w2_ref[...],
                preferred_element_type=jnp.float32)     # (TM, F_pad) f32 acc
    o_ref[...] = (o + b2_ref[...]).astype(o_ref.dtype)  # lane-dense, unmasked store


def _pick_block_m(n, requested=512, min_bm=128):
    """Largest row tile <= requested that keeps >= 2 (ideally even) grid steps."""
    bm = min(requested, max(min_bm, pl.next_power_of_2(max(n, 1))))
    bm = max(bm, min_bm)
    # v7x has 2 TensorCores sharing the "parallel" grid axis: keep >= 2 steps.
    while bm > min_bm and pl.cdiv(n, bm) < 2:
        bm //= 2
    # Prefer an even step count so the two cores stay balanced.
    if bm > min_bm and pl.cdiv(n, bm) % 2 == 1 and pl.cdiv(n, bm // 2) % 2 == 0:
        bm //= 2
    return bm


def nonlinear_generator_forward(feats, prev_feats, proto_g, proto_c,
                                w1, b1, w2, b2, *,
                                block_m=512, compute_dtype=jnp.bfloat16,
                                out_dtype=None):
    """JAX/Pallas equivalent of NonlinearGenerator.forward.

    feats/prev_feats/proto_g/proto_c: [N, *]; their concat along dim=1 is [N, 2F].
    w1: [2F, H], b1: [H], w2: [H, F], b2: [F]  (weights stored as in x out).
    """
    parts = [feats, prev_feats, proto_g, proto_c]
    n = feats.shape[0]
    widths = [p.shape[1] for p in parts]
    d_in = sum(widths)
    h_dim = w1.shape[1]
    f_dim = w2.shape[1]
    assert w1.shape[0] == d_in and b1.shape == (h_dim,)
    assert w2.shape[0] == h_dim and b2.shape == (f_dim,)
    out_dtype = feats.dtype if out_dtype is None else out_dtype

    # Lane-dense output: pad output columns to a multiple of 128 (unmasked stores).
    f_pad = max(128, pl.cdiv(f_dim, 128) * 128)
    if f_pad != f_dim:
        w2 = jnp.pad(w2, ((0, 0), (0, f_pad - f_dim)))
        b2 = jnp.pad(b2, ((0, f_pad - f_dim),))

    # Row tiling: amortize per-step overhead; zero-pad rows instead of asserting.
    bm = _pick_block_m(n, block_m)
    n_pad = pl.cdiv(n, bm) * bm
    if n_pad != n:
        parts = [jnp.pad(p, ((0, n_pad - n), (0, 0))) for p in parts]

    # Weights pre-cast once to bf16 (tiny); activations stay f32 in HBM and are
    # cast inside the kernel.  W1 is pre-sliced per input part for split-K.
    offs = [0]
    for w in widths:
        offs.append(offs[-1] + w)
    w1_parts = [w1[offs[i]:offs[i + 1], :].astype(compute_dtype) for i in range(4)]
    w2c = w2.astype(compute_dtype)
    b1_2d = b1.reshape(1, h_dim).astype(jnp.float32)
    b2_2d = b2.reshape(1, f_pad).astype(jnp.float32)

    grid = (n_pad // bm,)

    part_specs = [pl.BlockSpec((bm, w), lambda i: (i, 0)) for w in widths]
    w1_specs = [pl.BlockSpec((w, h_dim), lambda i: (0, 0)) for w in widths]
    rest_specs = [
        pl.BlockSpec((1, h_dim), lambda i: (0, 0)),      # b1 resident
        pl.BlockSpec((h_dim, f_pad), lambda i: (0, 0)),  # W2 resident
        pl.BlockSpec((1, f_pad), lambda i: (0, 0)),      # b2 resident
    ]

    out = pl.pallas_call(
        functools.partial(_mlp_kernel, compute_dtype=compute_dtype),
        out_shape=jax.ShapeDtypeStruct((n_pad, f_pad), out_dtype),
        grid=grid,
        in_specs=part_specs + w1_specs + rest_specs,
        out_specs=pl.BlockSpec((bm, f_pad), lambda i: (i, 0)),
        compiler_params=pltpu.CompilerParams(
            dimension_semantics=("parallel",),
        ),
    )(*parts, *w1_parts, b1_2d, w2c, b2_2d)

    if n_pad == n and f_pad == f_dim:
        return out
    return out[:n, :f_dim]


def _reference(feats, prev_feats, proto_g, proto_c, w1, b1, w2, b2,
               compute_dtype=jnp.bfloat16):
    # Same numerics as the kernel: bf16 MXU operands, f32 accumulation/epilogue.
    x = jnp.concatenate([feats, prev_feats, proto_g, proto_c], axis=1).astype(compute_dtype)
    h = jnp.dot(x, w1.astype(compute_dtype), preferred_element_type=jnp.float32) + b1
    h = jnp.maximum(h, 0.0).astype(compute_dtype)
    o = jnp.dot(h, w2.astype(compute_dtype), preferred_element_type=jnp.float32) + b2
    return o.astype(feats.dtype)


if __name__ == "__main__":
    # feature_dim F = 64, hidden_dim H = 128, batch N = 200 (exercises row padding;
    # block_m resolves to 128 -> 2 even grid steps so both v7x TensorCores get work).
    F_DIM = 64
    H_DIM = 128
    N = 200
    PART = (2 * F_DIM) // 4  # 32 features per input tensor; concat -> [N, 128]

    key = jax.random.PRNGKey(0)
    k_f, k_p, k_g, k_c, k_w1, k_b1, k_w2, k_b2 = jax.random.split(key, 8)

    feats = jax.random.normal(k_f, (N, PART), dtype=jnp.float32)
    prev_feats = jax.random.normal(k_p, (N, PART), dtype=jnp.float32)
    proto_g = jax.random.normal(k_g, (N, PART), dtype=jnp.float32)
    proto_c = jax.random.normal(k_c, (N, PART), dtype=jnp.float32)

    # PyTorch Linear weight is [out, in]; we store [in, out].
    w1 = jax.random.normal(k_w1, (2 * F_DIM, H_DIM), dtype=jnp.float32) / jnp.sqrt(2.0 * F_DIM)
    b1 = jax.random.normal(k_b1, (H_DIM,), dtype=jnp.float32) * 0.01
    w2 = jax.random.normal(k_w2, (H_DIM, F_DIM), dtype=jnp.float32) / jnp.sqrt(1.0 * H_DIM)
    b2 = jax.random.normal(k_b2, (F_DIM,), dtype=jnp.float32) * 0.01

    run = jax.jit(functools.partial(nonlinear_generator_forward, block_m=512))
    out = run(feats, prev_feats, proto_g, proto_c, w1, b1, w2, b2)
    out = jax.block_until_ready(out)

    ref = _reference(feats, prev_feats, proto_g, proto_c, w1, b1, w2, b2)
    assert out.shape == (N, F_DIM), out.shape
    assert jnp.allclose(out, ref, atol=1e-2, rtol=1e-2), "mismatch vs reference"

    print("KERNEL_OK")
</pallas_src>

<mosaic_0001>
module attributes {stable_mosaic.version = 11 : i64} {
  func.func @_mlp_kernel(%arg0: i32, %arg1: memref<128x32xf32, #tpu.memory_space<vmem>>, %arg2: memref<128x32xf32, #tpu.memory_space<vmem>>, %arg3: memref<128x32xf32, #tpu.memory_space<vmem>>, %arg4: memref<128x32xf32, #tpu.memory_space<vmem>>, %arg5: memref<32x128xbf16, #tpu.memory_space<vmem>>, %arg6: memref<32x128xbf16, #tpu.memory_space<vmem>>, %arg7: memref<32x128xbf16, #tpu.memory_space<vmem>>, %arg8: memref<32x128xbf16, #tpu.memory_space<vmem>>, %arg9: memref<1x128xf32, #tpu.memory_space<vmem>>, %arg10: memref<128x128xbf16, #tpu.memory_space<vmem>>, %arg11: memref<1x128xf32, #tpu.memory_space<vmem>>, %arg12: memref<128x128xf32, #tpu.memory_space<vmem>>) attributes {dimension_semantics = [#tpu.dimension_semantics<parallel>], iteration_bounds = array<i64: 2>, scalar_prefetch = 0 : i64, scratch_operands = 0 : i64, tpu.core_type = #tpu.core_type<tc>, window_params = [{transform_indices = @transform_0, window_bounds = array<i64: 128, 32>}, {transform_indices = @transform_1, window_bounds = array<i64: 128, 32>}, {transform_indices = @transform_2, window_bounds = array<i64: 128, 32>}, {transform_indices = @transform_3, window_bounds = array<i64: 128, 32>}, {pipeline_mode = #tpu.pipeline_mode<synchronous>, transform_indices = @transform_4, window_bounds = array<i64: 32, 128>}, {pipeline_mode = #tpu.pipeline_mode<synchronous>, transform_indices = @transform_5, window_bounds = array<i64: 32, 128>}, {pipeline_mode = #tpu.pipeline_mode<synchronous>, transform_indices = @transform_6, window_bounds = array<i64: 32, 128>}, {pipeline_mode = #tpu.pipeline_mode<synchronous>, transform_indices = @transform_7, window_bounds = array<i64: 32, 128>}, {pipeline_mode = #tpu.pipeline_mode<synchronous>, transform_indices = @transform_8, window_bounds = array<i64: 1, 128>}, {pipeline_mode = #tpu.pipeline_mode<synchronous>, transform_indices = @transform_9, window_bounds = array<i64: 128, 128>}, {pipeline_mode = #tpu.pipeline_mode<synchronous>, transform_indices = @transform_10, window_bounds = array<i64: 1, 128>}, {transform_indices = @transform_11, window_bounds = array<i64: 128, 128>}]} {
    %c0 = arith.constant 0 : index
    %c0_0 = arith.constant 0 : index
    %0 = vector.load %arg1[%c0, %c0_0] : memref<128x32xf32, #tpu.memory_space<vmem>>, vector<128x32xf32>
    %1 = arith.truncf %0 : vector<128x32xf32> to vector<128x32xbf16>
    %c0_1 = arith.constant 0 : index
    %c0_2 = arith.constant 0 : index
    %2 = vector.load %arg5[%c0_1, %c0_2] : memref<32x128xbf16, #tpu.memory_space<vmem>>, vector<32x128xbf16>
    %cst = arith.constant dense<0.000000e+00> : vector<128x128xf32>
    %3 = tpu.matmul %1, %2, %cst {dimension_numbers = #tpu.dot_dimension_numbers<[1], [0], [0], [1], [0, 0, 1, 1], [], []>} : vector<128x32xbf16>, vector<32x128xbf16>, vector<128x128xf32> -> vector<128x128xf32>
    %c0_3 = arith.constant 0 : index
    %c0_4 = arith.constant 0 : index
    %4 = vector.load %arg2[%c0_3, %c0_4] : memref<128x32xf32, #tpu.memory_space<vmem>>, vector<128x32xf32>
    %5 = arith.truncf %4 : vector<128x32xf32> to vector<128x32xbf16>
    %c0_5 = arith.constant 0 : index
    %c0_6 = arith.constant 0 : index
    %6 = vector.load %arg6[%c0_5, %c0_6] : memref<32x128xbf16, #tpu.memory_space<vmem>>, vector<32x128xbf16>
    %cst_7 = arith.constant dense<0.000000e+00> : vector<128x128xf32>
    %7 = tpu.matmul %5, %6, %cst_7 {dimension_numbers = #tpu.dot_dimension_numbers<[1], [0], [0], [1], [0, 0, 1, 1], [], []>} : vector<128x32xbf16>, vector<32x128xbf16>, vector<128x128xf32> -> vector<128x128xf32>
    %8 = arith.addf %3, %7 : vector<128x128xf32>
    %c0_8 = arith.constant 0 : index
    %c0_9 = arith.constant 0 : index
    %9 = vector.load %arg3[%c0_8, %c0_9] : memref<128x32xf32, #tpu.memory_space<vmem>>, vector<128x32xf32>
    %10 = arith.truncf %9 : vector<128x32xf32> to vector<128x32xbf16>
    %c0_10 = arith.constant 0 : index
    %c0_11 = arith.constant 0 : index
    %11 = vector.load %arg7[%c0_10, %c0_11] : memref<32x128xbf16, #tpu.memory_space<vmem>>, vector<32x128xbf16>
    %cst_12 = arith.constant dense<0.000000e+00> : vector<128x128xf32>
    %12 = tpu.matmul %10, %11, %cst_12 {dimension_numbers = #tpu.dot_dimension_numbers<[1], [0], [0], [1], [0, 0, 1, 1], [], []>} : vector<128x32xbf16>, vector<32x128xbf16>, vector<128x128xf32> -> vector<128x128xf32>
    %13 = arith.addf %8, %12 : vector<128x128xf32>
    %c0_13 = arith.constant 0 : index
    %c0_14 = arith.constant 0 : index
    %14 = vector.load %arg4[%c0_13, %c0_14] : memref<128x32xf32, #tpu.memory_space<vmem>>, vector<128x32xf32>
    %15 = arith.truncf %14 : vector<128x32xf32> to vector<128x32xbf16>
    %c0_15 = arith.constant 0 : index
    %c0_16 = arith.constant 0 : index
    %16 = vector.load %arg8[%c0_15, %c0_16] : memref<32x128xbf16, #tpu.memory_space<vmem>>, vector<32x128xbf16>
    %cst_17 = arith.constant dense<0.000000e+00> : vector<128x128xf32>
    %17 = tpu.matmul %15, %16, %cst_17 {dimension_numbers = #tpu.dot_dimension_numbers<[1], [0], [0], [1], [0, 0, 1, 1], [], []>} : vector<128x32xbf16>, vector<32x128xbf16>, vector<128x128xf32> -> vector<128x128xf32>
    %18 = arith.addf %13, %17 : vector<128x128xf32>
    %c0_18 = arith.constant 0 : index
    %c0_19 = arith.constant 0 : index
    %19 = vector.load %arg9[%c0_18, %c0_19] : memref<1x128xf32, #tpu.memory_space<vmem>>, vector<1x128xf32>
    %20 = vector.broadcast %19 : vector<1x128xf32> to vector<128x128xf32>
    %21 = arith.addf %18, %20 : vector<128x128xf32>
    %cst_20 = arith.constant 0.000000e+00 : f32
    %22 = vector.broadcast %cst_20 : f32 to vector<128x128xf32>
    %23 = arith.maximumf %21, %22 : vector<128x128xf32>
    %24 = arith.truncf %23 : vector<128x128xf32> to vector<128x128xbf16>
    %c0_21 = arith.constant 0 : index
    %c0_22 = arith.constant 0 : index
    %25 = vector.load %arg10[%c0_21, %c0_22] : memref<128x128xbf16, #tpu.memory_space<vmem>>, vector<128x128xbf16>
    %cst_23 = arith.constant dense<0.000000e+00> : vector<128x128xf32>
    %26 = tpu.matmul %24, %25, %cst_23 {dimension_numbers = #tpu.dot_dimension_numbers<[1], [0], [0], [1], [0, 0, 1, 1], [], []>} : vector<128x128xbf16>, vector<128x128xbf16>, vector<128x128xf32> -> vector<128x128xf32>
    %c0_24 = arith.constant 0 : index
    %c0_25 = arith.constant 0 : index
    %27 = vector.load %arg11[%c0_24, %c0_25] : memref<1x128xf32, #tpu.memory_space<vmem>>, vector<1x128xf32>
    %28 = vector.broadcast %27 : vector<1x128xf32> to vector<128x128xf32>
    %29 = arith.addf %26, %28 : vector<128x128xf32>
    %c0_26 = arith.constant 0 : index
    %c0_27 = arith.constant 0 : index
    %30 = vector.load %arg12[%c0_26, %c0_27] : memref<128x128xf32, #tpu.memory_space<vmem>>, vector<128x128xf32>
    tpu.vector_store %arg12[%c0_26, %c0_27], %29 {strides = array<i32>} : memref<128x128xf32, #tpu.memory_space<vmem>>, vector<128x128xf32>,
    return
  }
  func.func @transform_0(%arg0: i32) -> (i32, i32) {
    %c0_i32 = arith.constant 0 : i32
    %c0_i32_0 = arith.constant 0 : i32
    return %arg0, %c0_i32 : i32, i32
  }
  func.func @transform_1(%arg0: i32) -> (i32, i32) {
    %c0_i32 = arith.constant 0 : i32
    %c0_i32_0 = arith.constant 0 : i32
    return %arg0, %c0_i32 : i32, i32
  }
  func.func @transform_2(%arg0: i32) -> (i32, i32) {
    %c0_i32 = arith.constant 0 : i32
    %c0_i32_0 = arith.constant 0 : i32
    return %arg0, %c0_i32 : i32, i32
  }
  func.func @transform_3(%arg0: i32) -> (i32, i32) {
    %c0_i32 = arith.constant 0 : i32
    %c0_i32_0 = arith.constant 0 : i32
    return %arg0, %c0_i32 : i32, i32
  }
  func.func @transform_4(%arg0: i32) -> (i32, i32) {
    %c0_i32 = arith.constant 0 : i32
    %c0_i32_0 = arith.constant 0 : i32
    %c0_i32_1 = arith.constant 0 : i32
    return %c0_i32, %c0_i32_0 : i32, i32
  }
  func.func @transform_5(%arg0: i32) -> (i32, i32) {
    %c0_i32 = arith.constant 0 : i32
    %c0_i32_0 = arith.constant 0 : i32
    %c0_i32_1 = arith.constant 0 : i32
    return %c0_i32, %c0_i32_0 : i32, i32
  }
  func.func @transform_6(%arg0: i32) -> (i32, i32) {
    %c0_i32 = arith.constant 0 : i32
    %c0_i32_0 = arith.constant 0 : i32
    %c0_i32_1 = arith.constant 0 : i32
    return %c0_i32, %c0_i32_0 : i32, i32
  }
  func.func @transform_7(%arg0: i32) -> (i32, i32) {
    %c0_i32 = arith.constant 0 : i32
    %c0_i32_0 = arith.constant 0 : i32
    %c0_i32_1 = arith.constant 0 : i32
    return %c0_i32, %c0_i32_0 : i32, i32
  }
  func.func @transform_8(%arg0: i32) -> (i32, i32) {
    %c0_i32 = arith.constant 0 : i32
    %c0_i32_0 = arith.constant 0 : i32
    %c0_i32_1 = arith.constant 0 : i32
    return %c0_i32, %c0_i32_0 : i32, i32
  }
  func.func @transform_9(%arg0: i32) -> (i32, i32) {
    %c0_i32 = arith.constant 0 : i32
    %c0_i32_0 = arith.constant 0 : i32
    %c0_i32_1 = arith.constant 0 : i32
    return %c0_i32, %c0_i32_0 : i32, i32
  }
  func.func @transform_10(%arg0: i32) -> (i32, i32) {
    %c0_i32 = arith.constant 0 : i32
    %c0_i32_0 = arith.constant 0 : i32
    %c0_i32_1 = arith.constant 0 : i32
    return %c0_i32, %c0_i32_0 : i32, i32
  }
  func.func @transform_11(%arg0: i32) -> (i32, i32) {
    %c0_i32 = arith.constant 0 : i32
    %c0_i32_0 = arith.constant 0 : i32
    return %arg0, %c0_i32 : i32, i32
  }
}

</mosaic_0001>

<llo_original>
// kernel: nonlinear_generator_forward.1
$region0: #{nonlinear_generator_forward.1}
  #allocation0 [shape = 'u32[]', space=smem, size = 0x4, offset = 0x4, fixed_abs, tag = 'smem constant byte address 0x4 - core index']
  #allocation1 [shape = 'u32[72,128]{1,0:T(1,128)}', space=vmem, size = 0x9000, scoped, tag = 'internal scratch']
  %s0 = inlined_call_operand.vmem [shape: f32[256,32], index: 0, kind: input, shape index: {}]
  %s1 = inlined_call_operand.vmem [shape: f32[256,32], index: 1, kind: input, shape index: {}]
  %s2 = inlined_call_operand.vmem [shape: f32[256,32], index: 2, kind: input, shape index: {}]
  %s3 = inlined_call_operand.vmem [shape: f32[256,32], index: 3, kind: input, shape index: {}]
  %s4 = inlined_call_operand.vmem [shape: bf16[32,128], index: 4, kind: input, shape index: {}]
  %s5 = inlined_call_operand.vmem [shape: bf16[32,128], index: 5, kind: input, shape index: {}]
  %s6 = inlined_call_operand.vmem [shape: bf16[32,128], index: 6, kind: input, shape index: {}]
  %s7 = inlined_call_operand.vmem [shape: bf16[32,128], index: 7, kind: input, shape index: {}]
  %s8 = inlined_call_operand.vmem [shape: f32[1,128], index: 8, kind: input, shape index: {}]
  %s9 = inlined_call_operand.vmem [shape: bf16[128,128], index: 9, kind: input, shape index: {}]
  %s10 = inlined_call_operand.vmem [shape: f32[1,128], index: 10, kind: input, shape index: {}]
  %s11 = inlined_call_operand.vmem [shape: f32[256,128], index: 11, kind: output, shape index: {}]
  %s12 = sld [smem:[#allocation0]]
  $region77: #{nonlinear_generator_forward.1} parent=0
    _
  %s14 = ssub.s32 1, %s12
  %s15 = scalar_select 0, %s14, %s12
  loop: start=0, step=1, limit=4
  $region2: #{nonlinear_generator_forward.1} parent=0 // loop_pre_header
    _
  $region3: #{nonlinear_generator_forward.1} parent=0 // loop_header
    %s17 = sphi 0, %s21
    %p18 = scmp.ge.s32.totalorder %s17, 4
    %s27 = sphi 0, %s29
    %s30 = sphi 0, %s27
    %s31 = sphi 0, %s30
    %s47 = sphi 0, %s31
    %s53 = sphi 0, %s55
    %s56 = sphi 0, %s53
    %s57 = sphi 0, %s56
    %s73 = sphi 0, %s57
    %s79 = sphi 0, %s81
    %s82 = sphi 0, %s79
    %s83 = sphi 0, %s82
    %s99 = sphi 0, %s83
    %s105 = sphi 0, %s107
    %s108 = sphi 0, %s105
    %s109 = sphi 0, %s108
    %s125 = sphi 0, %s109
    %s129 = sphi 0, %s129
    %s131 = sphi 0, %s129
    %s132 = sphi 0, %s131
    %s146 = sphi 0, %s132
    %s150 = sphi 0, %s150
    %s152 = sphi 0, %s150
    %s153 = sphi 0, %s152
    %s167 = sphi 0, %s153
    %s171 = sphi 0, %s171
    %s173 = sphi 0, %s171
    %s174 = sphi 0, %s173
    %s188 = sphi 0, %s174
    %s192 = sphi 0, %s192
    %s194 = sphi 0, %s192
    %s195 = sphi 0, %s194
    %s209 = sphi 0, %s195
    %s213 = sphi 0, %s213
    %s215 = sphi 0, %s213
    %s216 = sphi 0, %s215
    %s230 = sphi 0, %s216
    %s234 = sphi 0, %s234
    %s236 = sphi 0, %s234
    %s237 = sphi 0, %s236
    %s251 = sphi 0, %s237
    %s255 = sphi 0, %s255
    %s257 = sphi 0, %s255
    %s258 = sphi 0, %s257
    %s272 = sphi 0, %s258
    %s278 = sphi 0, %s280
    %s281 = sphi 0, %s278
    %s282 = sphi 0, %s281
    %s298 = sphi 0, %s282
  $region4: #{nonlinear_generator_forward.1} parent=0 // loop_header_branch
    %20 = sbr.rel (%p18) target = $region8
  $region5: #{nonlinear_generator_forward.1} parent=0 // loop_body
    %s22 = ssub.s32 %s17, 1
    %s23 = ssub.s32 %s17, 2
    %s24 = sadd.s32 %s17, 1
    %s25 = ssub.s32 %s17, %s24
    %p26 = scmp.eq.s32.totalorder %s25, 0
    %s28 = sadd.s32 %s27, 1
    %s29 = scalar_select %p26, %s27, %s28
    %p32 = pneg %p26
    %p33 = scmp.eq.s32.totalorder %s17, 1
    %p34 = por %p32, %p33
    %p35 = scmp.ne.s32.totalorder %s27, %s30
    %p36 = scmp.eq.s32.totalorder %s17, 0
    %p37 = por %p35, %p36
    %p38 = scmp.ne.s32.totalorder %s27, %s30
    %p39 = scmp.eq.s32.totalorder %s22, 1
    %p40 = por %p38, %p39
    %p41 = scmp.ne.s32.totalorder %s30, %s31
    %p42 = scmp.eq.s32.totalorder %s22, 0
    %p43 = por %p41, %p42
    %p44 = scmp.ne.s32.totalorder %s30, %s31
    %p45 = scmp.eq.s32.totalorder %s23, 1
    %p46 = por %p44, %p45
    %p48 = scmp.ne.s32.totalorder %s31, %s47
    %p49 = scmp.eq.s32.totalorder %s23, 0
    %p50 = por %p48, %p49
    %s51 = ssub.s32 %s17, %s24
    %p52 = scmp.eq.s32.totalorder %s51, 0
    %s54 = sadd.s32 %s53, 1
    %s55 = scalar_select %p52, %s53, %s54
    %p58 = pneg %p52
    %p59 = scmp.eq.s32.totalorder %s17, 1
    %p60 = por %p58, %p59
    %p61 = scmp.ne.s32.totalorder %s53, %s56
    %p62 = scmp.eq.s32.totalorder %s17, 0
    %p63 = por %p61, %p62
    %p64 = scmp.ne.s32.totalorder %s53, %s56
    %p65 = scmp.eq.s32.totalorder %s22, 1
    %p66 = por %p64, %p65
    %p67 = scmp.ne.s32.totalorder %s56, %s57
    %p68 = scmp.eq.s32.totalorder %s22, 0
    %p69 = por %p67, %p68
    %p70 = scmp.ne.s32.totalorder %s56, %s57
    %p71 = scmp.eq.s32.totalorder %s23, 1
    %p72 = por %p70, %p71
    %p74 = scmp.ne.s32.totalorder %s57, %s73
    %p75 = scmp.eq.s32.totalorder %s23, 0
    %p76 = por %p74, %p75
    %s77 = ssub.s32 %s17, %s24
    %p78 = scmp.eq.s32.totalorder %s77, 0
    %s80 = sadd.s32 %s79, 1
    %s81 = scalar_select %p78, %s79, %s80
    %p84 = pneg %p78
    %p85 = scmp.eq.s32.totalorder %s17, 1
    %p86 = por %p84, %p85
    %p87 = scmp.ne.s32.totalorder %s79, %s82
    %p88 = scmp.eq.s32.totalorder %s17, 0
    %p89 = por %p87, %p88
    %p90 = scmp.ne.s32.totalorder %s79, %s82
    %p91 = scmp.eq.s32.totalorder %s22, 1
    %p92 = por %p90, %p91
    %p93 = scmp.ne.s32.totalorder %s82, %s83
    %p94 = scmp.eq.s32.totalorder %s22, 0
    %p95 = por %p93, %p94
    %p96 = scmp.ne.s32.totalorder %s82, %s83
    %p97 = scmp.eq.s32.totalorder %s23, 1
    %p98 = por %p96, %p97
    %p100 = scmp.ne.s32.totalorder %s83, %s99
    %p101 = scmp.eq.s32.totalorder %s23, 0
    %p102 = por %p100, %p101
    %s103 = ssub.s32 %s17, %s24
    %p104 = scmp.eq.s32.totalorder %s103, 0
    %s106 = sadd.s32 %s105, 1
    %s107 = scalar_select %p104, %s105, %s106
    %p110 = pneg %p104
    %p111 = scmp.eq.s32.totalorder %s17, 1
    %p112 = por %p110, %p111
    %p113 = scmp.ne.s32.totalorder %s105, %s108
    %p114 = scmp.eq.s32.totalorder %s17, 0
    %p115 = por %p113, %p114
    %p116 = scmp.ne.s32.totalorder %s105, %s108
    %p117 = scmp.eq.s32.totalorder %s22, 1
    %p118 = por %p116, %p117
    %p119 = scmp.ne.s32.totalorder %s108, %s109
    %p120 = scmp.eq.s32.totalorder %s22, 0
    %p121 = por %p119, %p120
    %p122 = scmp.ne.s32.totalorder %s108, %s109
    %p123 = scmp.eq.s32.totalorder %s23, 1
    %p124 = por %p122, %p123
    %p126 = scmp.ne.s32.totalorder %s109, %s125
    %p127 = scmp.eq.s32.totalorder %s23, 0
    %p128 = por %p126, %p127
    %s130 = sadd.s32 %s129, 1
    %p133 = scmp.eq.s32.totalorder %s17, 1
    %p134 = scmp.ne.s32.totalorder %s129, %s131
    %p135 = scmp.eq.s32.totalorder %s17, 0
    %p136 = por %p134, %p135
    %p137 = scmp.ne.s32.totalorder %s129, %s131
    %p138 = scmp.eq.s32.totalorder %s22, 1
    %p139 = por %p137, %p138
    %p140 = scmp.ne.s32.totalorder %s131, %s132
    %p141 = scmp.eq.s32.totalorder %s22, 0
    %p142 = por %p140, %p141
    %p143 = scmp.ne.s32.totalorder %s131, %s132
    %p144 = scmp.eq.s32.totalorder %s23, 1
    %p145 = por %p143, %p144
    %p147 = scmp.ne.s32.totalorder %s132, %s146
    %p148 = scmp.eq.s32.totalorder %s23, 0
    %p149 = por %p147, %p148
    %s151 = sadd.s32 %s150, 1
    %p154 = scmp.eq.s32.totalorder %s17, 1
    %p155 = scmp.ne.s32.totalorder %s150, %s152
    %p156 = scmp.eq.s32.totalorder %s17, 0
    %p157 = por %p155, %p156
    %p158 = scmp.ne.s32.totalorder %s150, %s152
    %p159 = scmp.eq.s32.totalorder %s22, 1
    %p160 = por %p158, %p159
    %p161 = scmp.ne.s32.totalorder %s152, %s153
    %p162 = scmp.eq.s32.totalorder %s22, 0
    %p163 = por %p161, %p162
    %p164 = scmp.ne.s32.totalorder %s152, %s153
    %p165 = scmp.eq.s32.totalorder %s23, 1
    %p166 = por %p164, %p165
    %p168 = scmp.ne.s32.totalorder %s153, %s167
    %p169 = scmp.eq.s32.totalorder %s23, 0
    %p170 = por %p168, %p169
    %s172 = sadd.s32 %s171, 1
    %p175 = scmp.eq.s32.totalorder %s17, 1
    %p176 = scmp.ne.s32.totalorder %s171, %s173
    %p177 = scmp.eq.s32.totalorder %s17, 0
    %p178 = por %p176, %p177
    %p179 = scmp.ne.s32.totalorder %s171, %s173
    %p180 = scmp.eq.s32.totalorder %s22, 1
    %p181 = por %p179, %p180
    %p182 = scmp.ne.s32.totalorder %s173, %s174
    %p183 = scmp.eq.s32.totalorder %s22, 0
    %p184 = por %p182, %p183
    %p185 = scmp.ne.s32.totalorder %s173, %s174
    %p186 = scmp.eq.s32.totalorder %s23, 1
    %p187 = por %p185, %p186
    %p189 = scmp.ne.s32.totalorder %s174, %s188
    %p190 = scmp.eq.s32.totalorder %s23, 0
    %p191 = por %p189, %p190
    %s193 = sadd.s32 %s192, 1
    %p196 = scmp.eq.s32.totalorder %s17, 1
    %p197 = scmp.ne.s32.totalorder %s192, %s194
    %p198 = scmp.eq.s32.totalorder %s17, 0
    %p199 = por %p197, %p198
    %p200 = scmp.ne.s32.totalorder %s192, %s194
    %p201 = scmp.eq.s32.totalorder %s22, 1
    %p202 = por %p200, %p201
    %p203 = scmp.ne.s32.totalorder %s194, %s195
    %p204 = scmp.eq.s32.totalorder %s22, 0
    %p205 = por %p203, %p204
    %p206 = scmp.ne.s32.totalorder %s194, %s195
    %p207 = scmp.eq.s32.totalorder %s23, 1
    %p208 = por %p206, %p207
    %p210 = scmp.ne.s32.totalorder %s195, %s209
    %p211 = scmp.eq.s32.totalorder %s23, 0
    %p212 = por %p210, %p211
    %s214 = sadd.s32 %s213, 1
    %p217 = scmp.eq.s32.totalorder %s17, 1
    %p218 = scmp.ne.s32.totalorder %s213, %s215
    %p219 = scmp.eq.s32.totalorder %s17, 0
    %p220 = por %p218, %p219
    %p221 = scmp.ne.s32.totalorder %s213, %s215
    %p222 = scmp.eq.s32.totalorder %s22, 1
    %p223 = por %p221, %p222
    %p224 = scmp.ne.s32.totalorder %s215, %s216
    %p225 = scmp.eq.s32.totalorder %s22, 0
    %p226 = por %p224, %p225
    %p227 = scmp.ne.s32.totalorder %s215, %s216
    %p228 = scmp.eq.s32.totalorder %s23, 1
    %p229 = por %p227, %p228
    %p231 = scmp.ne.s32.totalorder %s216, %s230
    %p232 = scmp.eq.s32.totalorder %s23, 0
    %p233 = por %p231, %p232
    %s235 = sadd.s32 %s234, 1
    %p238 = scmp.eq.s32.totalorder %s17, 1
    %p239 = scmp.ne.s32.totalorder %s234, %s236
    %p240 = scmp.eq.s32.totalorder %s17, 0
    %p241 = por %p239, %p240
    %p242 = scmp.ne.s32.totalorder %s234, %s236
    %p243 = scmp.eq.s32.totalorder %s22, 1
    %p244 = por %p242, %p243
    %p245 = scmp.ne.s32.totalorder %s236, %s237
    %p246 = scmp.eq.s32.totalorder %s22, 0
    %p247 = por %p245, %p246
    %p248 = scmp.ne.s32.totalorder %s236, %s237
    %p249 = scmp.eq.s32.totalorder %s23, 1
    %p250 = por %p248, %p249
    %p252 = scmp.ne.s32.totalorder %s237, %s251
    %p253 = scmp.eq.s32.totalorder %s23, 0
    %p254 = por %p252, %p253
    %s256 = sadd.s32 %s255, 1
    %p259 = scmp.eq.s32.totalorder %s17, 1
    %p260 = scmp.ne.s32.totalorder %s255, %s257
    %p261 = scmp.eq.s32.totalorder %s17, 0
    %p262 = por %p260, %p261
    %p263 = scmp.ne.s32.totalorder %s255, %s257
    %p264 = scmp.eq.s32.totalorder %s22, 1
    %p265 = por %p263, %p264
    %p266 = scmp.ne.s32.totalorder %s257, %s258
    %p267 = scmp.eq.s32.totalorder %s22, 0
    %p268 = por %p266, %p267
    %p269 = scmp.ne.s32.totalorder %s257, %s258
    %p270 = scmp.eq.s32.totalorder %s23, 1
    %p271 = por %p269, %p270
    %p273 = scmp.ne.s32.totalorder %s258, %s272
    %p274 = scmp.eq.s32.totalorder %s23, 0
    %p275 = por %p273, %p274
    %s276 = ssub.s32 %s17, %s24
    %p277 = scmp.eq.s32.totalorder %s276, 0
    %s279 = sadd.s32 %s278, 1
    %s280 = scalar_select %p277, %s278, %s279
    %p283 = pneg %p277
    %p284 = scmp.eq.s32.totalorder %s17, 1
    %p285 = por %p283, %p284
    %p286 = scmp.ne.s32.totalorder %s278, %s281
    %p287 = scmp.eq.s32.totalorder %s17, 0
    %p288 = por %p286, %p287
    %p289 = scmp.ne.s32.totalorder %s278, %s281
    %p290 = scmp.eq.s32.totalorder %s22, 1
    %p291 = por %p289, %p290
    %p292 = scmp.ne.s32.totalorder %s281, %s282
    %p293 = scmp.eq.s32.totalorder %s22, 0
    %p294 = por %p292, %p293
    %p295 = scmp.ne.s32.totalorder %s281, %s282
    %p296 = scmp.eq.s32.totalorder %s23, 1
    %p297 = por %p295, %p296
    %p299 = scmp.ne.s32.totalorder %s282, %s298
    %p300 = scmp.eq.s32.totalorder %s23, 0
    %p301 = por %p299, %p300
    %p302 = scmp.le.s32.totalorder 1, %s17
    %p303 = scmp.lt.s32.totalorder %s17, 3
    %p304 = pnand %p302, %p303
    %p305 = pneg %p304
    // Predicated region
    $region9: #{nonlinear_generator_forward.1} parent=5 // pred_check
      _
    $region10: #{nonlinear_generator_forward.1} parent=5 // pred_check_branch
      %307 = sbr.rel (%p304) target = $region12
    $region11: #{nonlinear_generator_forward.1} parent=5 // pred_region
      %s308 = ssub.s32 %s17, 1
      // Predicated region
      $region13: #{nonlinear_generator_forward.1} parent=11 // pred_check
        %p309 = pneg %p142
      $region14: #{nonlinear_generator_forward.1} parent=11 // pred_check_branch
        %311 = sbr.rel (%p309) target = $region16
      $region15: #{nonlinear_generator_forward.1} parent=11 // pred_region
        _
      $region16: #{nonlinear_generator_forward.1} parent=11 // pred_fallthru
        _
      // Predicated region
      $region17: #{nonlinear_generator_forward.1} parent=11 // pred_check
        %p312 = pneg %p163
      $region18: #{nonlinear_generator_forward.1} parent=11 // pred_check_branch
        %314 = sbr.rel (%p312) target = $region20
      $region19: #{nonlinear_generator_forward.1} parent=11 // pred_region
        _
      $region20: #{nonlinear_generator_forward.1} parent=11 // pred_fallthru
        _
      // Predicated region
      $region21: #{nonlinear_generator_forward.1} parent=11 // pred_check
        %p315 = pneg %p184
      $region22: #{nonlinear_generator_forward.1} parent=11 // pred_check_branch
        %317 = sbr.rel (%p315) target = $region24
      $region23: #{nonlinear_generator_forward.1} parent=11 // pred_region
        _
      $region24: #{nonlinear_generator_forward.1} parent=11 // pred_fallthru
        _
      // Predicated region
      $region25: #{nonlinear_generator_forward.1} parent=11 // pred_check
        %p318 = pneg %p205
      $region26: #{nonlinear_generator_forward.1} parent=11 // pred_check_branch
        %320 = sbr.rel (%p318) target = $region28
      $region27: #{nonlinear_generator_forward.1} parent=11 // pred_region
        _
      $region28: #{nonlinear_generator_forward.1} parent=11 // pred_fallthru
        _
      // Predicated region
      $region29: #{nonlinear_generator_forward.1} parent=11 // pred_check
        %p321 = pneg %p226
      $region30: #{nonlinear_generator_forward.1} parent=11 // pred_check_branch
        %323 = sbr.rel (%p321) target = $region32
      $region31: #{nonlinear_generator_forward.1} parent=11 // pred_region
        _
      $region32: #{nonlinear_generator_forward.1} parent=11 // pred_fallthru
        _
      // Predicated region
      $region33: #{nonlinear_generator_forward.1} parent=11 // pred_check
        %p324 = pneg %p247
      $region34: #{nonlinear_generator_forward.1} parent=11 // pred_check_branch
        %326 = sbr.rel (%p324) target = $region36
      $region35: #{nonlinear_generator_forward.1} parent=11 // pred_region
        _
      $region36: #{nonlinear_generator_forward.1} parent=11 // pred_fallthru
        _
      // Predicated region
      $region37: #{nonlinear_generator_forward.1} parent=11 // pred_check
        %p327 = pneg %p268
      $region38: #{nonlinear_generator_forward.1} parent=11 // pred_check_branch
        %329 = sbr.rel (%p327) target = $region40
      $region39: #{nonlinear_generator_forward.1} parent=11 // pred_region
        _
      $region40: #{nonlinear_generator_forward.1} parent=11 // pred_fallthru
        _
    $region12: #{nonlinear_generator_forward.1} parent=5 // pred_fallthru
      _
    %p330 = scmp.lt.s32.totalorder %s17, 2
    // Predicated region
    $region41: #{nonlinear_generator_forward.1} parent=5 // pred_check
      %p331 = pneg %p330
    $region42: #{nonlinear_generator_forward.1} parent=5 // pred_check_branch
      %333 = sbr.rel (%p331) target = $region44
    $region43: #{nonlinear_generator_forward.1} parent=5 // pred_region
      // Predicated region
      $region45: #{nonlinear_generator_forward.1} parent=43 // pred_check
        %p334 = pneg %p37
      $region46: #{nonlinear_generator_forward.1} parent=43 // pred_check_branch
        %336 = sbr.rel (%p334) target = $region48
      $region47: #{nonlinear_generator_forward.1} parent=43 // pred_region
        %s337 = smul.u32 16, %s17
        %p338 = scmp.lt.s32.totalorder %s337, 31
        %s339 = scalar_select %p338, %s337, 31
        %s340 = smul.addr %s339, 8
        %s341 = scalar_lea.vmem %s0, %s340
        %s342 = smul.u32 16, %s17
      $region48: #{nonlinear_generator_forward.1} parent=43 // pred_fallthru
        _
      // Predicated region
      $region49: #{nonlinear_generator_forward.1} parent=43 // pred_check
        %p343 = pneg %p63
      $region50: #{nonlinear_generator_forward.1} parent=43 // pred_check_branch
        %345 = sbr.rel (%p343) target = $region52
      $region51: #{nonlinear_generator_forward.1} parent=43 // pred_region
        %s346 = smul.u32 16, %s17
        %p347 = scmp.lt.s32.totalorder %s346, 31
        %s348 = scalar_select %p347, %s346, 31
        %s349 = smul.addr %s348, 8
        %s350 = scalar_lea.vmem %s1, %s349
        %s351 = smul.u32 16, %s17
      $region52: #{nonlinear_generator_forward.1} parent=43 // pred_fallthru
        _
      // Predicated region
      $region53: #{nonlinear_generator_forward.1} parent=43 // pred_check
        %p352 = pneg %p89
      $region54: #{nonlinear_generator_forward.1} parent=43 // pred_check_branch
        %354 = sbr.rel (%p352) target = $region56
      $region55: #{nonlinear_generator_forward.1} parent=43 // pred_region
        %s355 = smul.u32 16, %s17
        %p356 = scmp.lt.s32.totalorder %s355, 31
        %s357 = scalar_select %p356, %s355, 31
        %s358 = smul.addr %s357, 8
        %s359 = scalar_lea.vmem %s2, %s358
        %s360 = smul.u32 16, %s17
      $region56: #{nonlinear_generator_forward.1} parent=43 // pred_fallthru
        _
      // Predicated region
      $region57: #{nonlinear_generator_forward.1} parent=43 // pred_check
        %p361 = pneg %p115
      $region58: #{nonlinear_generator_forward.1} parent=43 // pred_check_branch
        %363 = sbr.rel (%p361) target = $region60
      $region59: #{nonlinear_generator_forward.1} parent=43 // pred_region
        %s364 = smul.u32 16, %s17
        %p365 = scmp.lt.s32.totalorder %s364, 31
        %s366 = scalar_select %p365, %s364, 31
        %s367 = smul.addr %s366, 8
        %s368 = scalar_lea.vmem %s3, %s367
        %s369 = smul.u32 16, %s17
      $region60: #{nonlinear_generator_forward.1} parent=43 // pred_fallthru
        _
    $region44: #{nonlinear_generator_forward.1} parent=5 // pred_fallthru
      _
    %p370 = scmp.le.s32.totalorder 1, %s17
    %p371 = scmp.lt.s32.totalorder %s17, 3
    %p372 = pnand %p370, %p371
    %p373 = pneg %p372
    // Predicated region
    $region61: #{nonlinear_generator_forward.1} parent=5 // pred_check
      _
    $region62: #{nonlinear_generator_forward.1} parent=5 // pred_check_branch
      %375 = sbr.rel (%p372) target = $region64
    $region63: #{nonlinear_generator_forward.1} parent=5 // pred_region
      %s376 = ssub.s32 %s17, 1
      %s377 = smul.u32 16, %s22
      %p378 = scmp.lt.s32.totalorder %s377, 31
      %s379 = scalar_select %p378, %s377, 31
      %s380 = smul.addr %s379, 8
      %s381 = scalar_lea.vmem %s0, %s380
      %p382 = pneg %p43
      %p383 = pneg %p40
      %s384 = smul.u32 16, %s22
      %p385 = scmp.lt.s32.totalorder %s384, 31
      %s386 = scalar_select %p385, %s384, 31
      %s387 = smul.addr %s386, 8
      %s388 = scalar_lea.vmem %s1, %s387
      %p389 = pneg %p69
      %p390 = pneg %p66
      %s391 = smul.u32 16, %s22
      %p392 = scmp.lt.s32.totalorder %s391, 31
      %s393 = scalar_select %p392, %s391, 31
      %s394 = smul.addr %s393, 8
      %s395 = scalar_lea.vmem %s2, %s394
      %p396 = pneg %p95
      %p397 = pneg %p92
      %s398 = smul.u32 16, %s22
      %p399 = scmp.lt.s32.totalorder %s398, 31
      %s400 = scalar_select %p399, %s398, 31
      %s401 = smul.addr %s400, 8
      %s402 = scalar_lea.vmem %s3, %s401
      %p403 = pneg %p121
      %p404 = pneg %p118
      %p405 = pneg %p142
      %p406 = pneg %p139
      %p407 = pneg %p163
      %p408 = pneg %p160
      %p409 = pneg %p184
      %p410 = pneg %p181
      %p411 = pneg %p205
      %p412 = pneg %p202
      %p413 = pneg %p226
      %p414 = pneg %p223
      %p415 = pneg %p247
      %p416 = pneg %p244
      %p417 = pneg %p268
      %p418 = pneg %p265
      %p419 = pneg %p294
      %p420 = pneg %p291
      %s421 = smul.u32 16, %s22
      %p422 = scmp.lt.s32.totalorder %s421, 31
      %s423 = scalar_select %p422, %s421, 31
      %s424 = smul.addr %s423, 8
      %s425 = scalar_lea.vmem %s11, %s424
      %s426 = smul.u32 16, %s22
      %p427 = scmp.lt.s32.totalorder %s426, 31
      %s428 = scalar_select %p427, %s426, 31
      %s429 = smul.addr %s428, 8
      %s430 = scalar_lea.vmem %s0, %s429
      %s431 = smul.u32 16, %s22
      %s432 = smul.u32 16, %s22
      %p433 = scmp.lt.s32.totalorder %s432, 31
      %s434 = scalar_select %p433, %s432, 31
      %s435 = smul.addr %s434, 8
      %s436 = scalar_lea.vmem %s1, %s435
      %s437 = smul.u32 16, %s22
      %s438 = smul.u32 16, %s22
      %p439 = scmp.lt.s32.totalorder %s438, 31
      %s440 = scalar_select %p439, %s438, 31
      %s441 = smul.addr %s440, 8
      %s442 = scalar_lea.vmem %s2, %s441
      %s443 = smul.u32 16, %s22
      %s444 = smul.u32 16, %s22
      %p445 = scmp.lt.s32.totalorder %s444, 31
      %s446 = scalar_select %p445, %s444, 31
      %s447 = smul.addr %s446, 8
      %s448 = scalar_lea.vmem %s3, %s447
      %s449 = smul.u32 16, %s22
      %s450 = smul.u32 16, %s22
      %p451 = scmp.lt.s32.totalorder %s450, 31
      %s452 = scalar_select %p451, %s450, 31
      %s453 = smul.addr %s452, 8
      %s454 = scalar_lea.vmem %s11, %s453
      %s455 = smul.u32 16, %s22
      %v457 = vld [vmem:[%s430] sm:$0xff]
      %v458 = vld [vmem:[%s430 + $0x8] sm:$0xff]
      %v459 = vld [vmem:[%s430 + $0x10] sm:$0xff]
      %v460 = vld [vmem:[%s430 + $0x18] sm:$0xff]
      %v461 = vld [vmem:[%s430 + $0x20] sm:$0xff]
      %v462 = vld [vmem:[%s430 + $0x28] sm:$0xff]
      %v463 = vld [vmem:[%s430 + $0x30] sm:$0xff]
      %v464 = vld [vmem:[%s430 + $0x38] sm:$0xff]
      %v465 = vld [vmem:[%s430 + $0x40] sm:$0xff]
      %v466 = vld [vmem:[%s430 + $0x48] sm:$0xff]
      %v467 = vld [vmem:[%s430 + $0x50] sm:$0xff]
      %v468 = vld [vmem:[%s430 + $0x58] sm:$0xff]
      %v469 = vld [vmem:[%s430 + $0x60] sm:$0xff]
      %v470 = vld [vmem:[%s430 + $0x68] sm:$0xff]
      %v471 = vld [vmem:[%s430 + $0x70] sm:$0xff]
      %v472 = vld [vmem:[%s430 + $0x78] sm:$0xff]
      %v473 = vpack.c.bf16 %v458, %v457
      %v474 = vpack.c.bf16 %v460, %v459
      %v475 = vpack.c.bf16 %v462, %v461
      %v476 = vpack.c.bf16 %v464, %v463
      %v477 = vpack.c.bf16 %v466, %v465
      %v478 = vpack.c.bf16 %v468, %v467
      %v479 = vpack.c.bf16 %v470, %v469
      %v480 = vpack.c.bf16 %v472, %v471
      %v481 = vld [vmem:[%s4] sm:$0xf]
      %v482 = vld [vmem:[%s4 + $0x4] sm:$0xf]
      %v483 = vld [vmem:[%s4 + $0x8] sm:$0xf]
      %v484 = vld [vmem:[%s4 + $0xc] sm:$0xf]
      %v485 = vld [vmem:[%s436] sm:$0xff]
      %v486 = vld [vmem:[%s436 + $0x8] sm:$0xff]
      %v487 = vld [vmem:[%s436 + $0x10] sm:$0xff]
      %v488 = vld [vmem:[%s436 + $0x18] sm:$0xff]
      %v489 = vld [vmem:[%s436 + $0x20] sm:$0xff]
      %v490 = vld [vmem:[%s436 + $0x28] sm:$0xff]
      %v491 = vld [vmem:[%s436 + $0x30] sm:$0xff]
      %v492 = vld [vmem:[%s436 + $0x38] sm:$0xff]
      %v493 = vld [vmem:[%s436 + $0x40] sm:$0xff]
      %v494 = vld [vmem:[%s436 + $0x48] sm:$0xff]
      %v495 = vld [vmem:[%s436 + $0x50] sm:$0xff]
      %v496 = vld [vmem:[%s436 + $0x58] sm:$0xff]
      %v497 = vld [vmem:[%s436 + $0x60] sm:$0xff]
      %v498 = vld [vmem:[%s436 + $0x68] sm:$0xff]
      %v499 = vld [vmem:[%s436 + $0x70] sm:$0xff]
      %v500 = vld [vmem:[%s436 + $0x78] sm:$0xff]
      %v501 = vpack.c.bf16 %v486, %v485
      %v502 = vpack.c.bf16 %v488, %v487
      %v503 = vpack.c.bf16 %v490, %v489
      %v504 = vpack.c.bf16 %v492, %v491
      %v505 = vpack.c.bf16 %v494, %v493
      %v506 = vpack.c.bf16 %v496, %v495
      %v507 = vpack.c.bf16 %v498, %v497
      %v508 = vpack.c.bf16 %v500, %v499
      %v509 = vld [vmem:[%s5] sm:$0xf]
      %v510 = vld [vmem:[%s5 + $0x4] sm:$0xf]
      %v511 = vld [vmem:[%s5 + $0x8] sm:$0xf]
      %v512 = vld [vmem:[%s5 + $0xc] sm:$0xf]
      %v517 = vunpack.c.l.b16 %v509
      %v518 = vunpack.c.l.b16 %v510
      %v519 = vunpack.c.l.b16 %v511
      %v520 = vunpack.c.l.b16 %v512
      %v521 = vpack.c.b16 %v518, %v517
      %v522 = vpack.c.b16 %v520, %v519
      %vm525 = vcmask 261120
      %v527 = vsel %vm525, %v501, 0
      %v530 = vsel %vm525, %v502, 0
      %v533 = vsel %vm525, %v503, 0
      %v536 = vsel %vm525, %v504, 0
      %v539 = vsel %vm525, %v505, 0
      %v542 = vsel %vm525, %v506, 0
      %v545 = vsel %vm525, %v507, 0
      %v548 = vsel %vm525, %v508, 0
      %550 = vmatpush.bf16.msra.mxu0 0
      %551 = vmatpush.bf16.msra.mxu0 0
      %552 = vmatpush.bf16.msra.mxu0 0
      %553 = vmatpush.bf16.msra.mxu0 0
      %554 = vmatpush.bf16.msra.mxu0 0
      %555 = vmatpush.bf16.msra.mxu0 0
      %556 = vmatpush.bf16.msra.mxu0 %v522
      %557 = vmatpush.bf16.msra.mxu0 %v521
      %558 = vmatmul.bf16.gmra.mxu0 %v527
      %v559 = vpop.f32.mrf.mxu0
      %v560 = vadd.f32 0.0, %v559
      %v561 = vpop.f32.mrf.mxu0
      %v562 = vadd.f32 0.0, %v561
      %563 = vmatmul.bf16.gmra.mxu0 %v530
      %v564 = vpop.f32.mrf.mxu0
      %v565 = vadd.f32 0.0, %v564
      %v566 = vpop.f32.mrf.mxu0
      %v567 = vadd.f32 0.0, %v566
      %568 = vmatmul.bf16.gmra.mxu0 %v533
      %v569 = vpop.f32.mrf.mxu0
      %v570 = vadd.f32 0.0, %v569
      %v571 = vpop.f32.mrf.mxu0
      %v572 = vadd.f32 0.0, %v571
      %573 = vmatmul.bf16.gmra.mxu0 %v536
      %v574 = vpop.f32.mrf.mxu0
      %v575 = vadd.f32 0.0, %v574
      %v576 = vpop.f32.mrf.mxu0
      %v577 = vadd.f32 0.0, %v576
      %578 = vmatmul.bf16.gmra.mxu0 %v539
      %v579 = vpop.f32.mrf.mxu0
      %v580 = vadd.f32 0.0, %v579
      %v581 = vpop.f32.mrf.mxu0
      %v582 = vadd.f32 0.0, %v581
      %583 = vmatmul.bf16.gmra.mxu0 %v542
      %v584 = vpop.f32.mrf.mxu0
      %v585 = vadd.f32 0.0, %v584
      %v586 = vpop.f32.mrf.mxu0
      %v587 = vadd.f32 0.0, %v586
      %588 = vmatmul.bf16.gmra.mxu0 %v545
      %v589 = vpop.f32.mrf.mxu0
      %v590 = vadd.f32 0.0, %v589
      %v591 = vpop.f32.mrf.mxu0
      %v592 = vadd.f32 0.0, %v591
      %593 = vmatmul.bf16.gmra.mxu0 %v548
      %v594 = vpop.f32.mrf.mxu0
      %v595 = vadd.f32 0.0, %v594
      %v596 = vpop.f32.mrf.mxu0
      %v597 = vadd.f32 0.0, %v596
      %598 = vdwg.mxu0
      %v603 = vunpack.c.l.b16 %v481
      %v604 = vunpack.c.l.b16 %v482
      %v605 = vunpack.c.l.b16 %v483
      %v606 = vunpack.c.l.b16 %v484
      %v607 = vpack.c.b16 %v604, %v603
      %v608 = vpack.c.b16 %v606, %v605
      %v612 = vsel %vm525, %v473, 0
      %v615 = vsel %vm525, %v474, 0
      %v618 = vsel %vm525, %v475, 0
      %v621 = vsel %vm525, %v476, 0
      %v624 = vsel %vm525, %v477, 0
      %v627 = vsel %vm525, %v478, 0
      %v630 = vsel %vm525, %v479, 0
      %v633 = vsel %vm525, %v480, 0
      %635 = vmatpush.bf16.msra.mxu0 0
      %636 = vmatpush.bf16.msra.mxu0 0
      %637 = vmatpush.bf16.msra.mxu0 0
      %638 = vmatpush.bf16.msra.mxu0 0
      %639 = vmatpush.bf16.msra.mxu0 0
      %640 = vmatpush.bf16.msra.mxu0 0
      %641 = vmatpush.bf16.msra.mxu0 %v608
      %642 = vmatpush.bf16.msra.mxu0 %v607
      %643 = vmatmul.bf16.gmra.mxu0 %v612
      %v644 = vpop.f32.mrf.mxu0
      %v645 = vadd.f32 %v560, %v644
      %v646 = vpop.f32.mrf.mxu0
      %v647 = vadd.f32 %v562, %v646
      %648 = vmatmul.bf16.gmra.mxu0 %v615
      %v649 = vpop.f32.mrf.mxu0
      %v650 = vadd.f32 %v565, %v649
      %v651 = vpop.f32.mrf.mxu0
      %v652 = vadd.f32 %v567, %v651
      %653 = vmatmul.bf16.gmra.mxu0 %v618
      %v654 = vpop.f32.mrf.mxu0
      %v655 = vadd.f32 %v570, %v654
      %v656 = vpop.f32.mrf.mxu0
      %v657 = vadd.f32 %v572, %v656
      %658 = vmatmul.bf16.gmra.mxu0 %v621
      %v659 = vpop.f32.mrf.mxu0
      %v660 = vadd.f32 %v575, %v659
      %v661 = vpop.f32.mrf.mxu0
      %v662 = vadd.f32 %v577, %v661
      %663 = vmatmul.bf16.gmra.mxu0 %v624
      %v664 = vpop.f32.mrf.mxu0
      %v665 = vadd.f32 %v580, %v664
      %v666 = vpop.f32.mrf.mxu0
      %v667 = vadd.f32 %v582, %v666
      %668 = vmatmul.bf16.gmra.mxu0 %v627
      %v669 = vpop.f32.mrf.mxu0
      %v670 = vadd.f32 %v585, %v669
      %v671 = vpop.f32.mrf.mxu0
      %v672 = vadd.f32 %v587, %v671
      %673 = vmatmul.bf16.gmra.mxu0 %v630
      %v674 = vpop.f32.mrf.mxu0
      %v675 = vadd.f32 %v590, %v674
      %v676 = vpop.f32.mrf.mxu0
      %v677 = vadd.f32 %v592, %v676
      %678 = vmatmul.bf16.gmra.mxu0 %v633
      %v679 = vpop.f32.mrf.mxu0
      %v680 = vadd.f32 %v595, %v679
      %v681 = vpop.f32.mrf.mxu0
      %v682 = vadd.f32 %v597, %v681
      %683 = vdwg.mxu0
      %v684 = vld [vmem:[%s442] sm:$0xff]
      %v685 = vld [vmem:[%s442 + $0x8] sm:$0xff]
      %v686 = vld [vmem:[%s442 + $0x10] sm:$0xff]
      %v687 = vld [vmem:[%s442 + $0x18] sm:$0xff]
      %v688 = vld [vmem:[%s442 + $0x20] sm:$0xff]
      %v689 = vld [vmem:[%s442 + $0x28] sm:$0xff]
      %v690 = vld [vmem:[%s442 + $0x30] sm:$0xff]
      %v691 = vld [vmem:[%s442 + $0x38] sm:$0xff]
      %v692 = vld [vmem:[%s442 + $0x40] sm:$0xff]
      %v693 = vld [vmem:[%s442 + $0x48] sm:$0xff]
      %v694 = vld [vmem:[%s442 + $0x50] sm:$0xff]
      %v695 = vld [vmem:[%s442 + $0x58] sm:$0xff]
      %v696 = vld [vmem:[%s442 + $0x60] sm:$0xff]
      %v697 = vld [vmem:[%s442 + $0x68] sm:$0xff]
      %v698 = vld [vmem:[%s442 + $0x70] sm:$0xff]
      %v699 = vld [vmem:[%s442 + $0x78] sm:$0xff]
      %v700 = vpack.c.bf16 %v685, %v684
      %v701 = vpack.c.bf16 %v687, %v686
      %v702 = vpack.c.bf16 %v689, %v688
      %v703 = vpack.c.bf16 %v691, %v690
      %v704 = vpack.c.bf16 %v693, %v692
      %v705 = vpack.c.bf16 %v695, %v694
      %v706 = vpack.c.bf16 %v697, %v696
      %v707 = vpack.c.bf16 %v699, %v698
      %v708 = vld [vmem:[%s6] sm:$0xf]
      %v709 = vld [vmem:[%s6 + $0x4] sm:$0xf]
      %v710 = vld [vmem:[%s6 + $0x8] sm:$0xf]
      %v711 = vld [vmem:[%s6 + $0xc] sm:$0xf]
      %v716 = vunpack.c.l.b16 %v708
      %v717 = vunpack.c.l.b16 %v709
      %v718 = vunpack.c.l.b16 %v710
      %v719 = vunpack.c.l.b16 %v711
      %v720 = vpack.c.b16 %v717, %v716
      %v721 = vpack.c.b16 %v719, %v718
      %v725 = vsel %vm525, %v700, 0
      %v728 = vsel %vm525, %v701, 0
      %v731 = vsel %vm525, %v702, 0
      %v734 = vsel %vm525, %v703, 0
      %v737 = vsel %vm525, %v704, 0
      %v740 = vsel %vm525, %v705, 0
      %v743 = vsel %vm525, %v706, 0
      %v746 = vsel %vm525, %v707, 0
      %748 = vmatpush.bf16.msra.mxu0 0
      %749 = vmatpush.bf16.msra.mxu0 0
      %750 = vmatpush.bf16.msra.mxu0 0
      %751 = vmatpush.bf16.msra.mxu0 0
      %752 = vmatpush.bf16.msra.mxu0 0
      %753 = vmatpush.bf16.msra.mxu0 0
      %754 = vmatpush.bf16.msra.mxu0 %v721
      %755 = vmatpush.bf16.msra.mxu0 %v720
      %756 = vmatmul.bf16.gmra.mxu0 %v725
      %v757 = vpop.f32.mrf.mxu0
      %v758 = vadd.f32 0.0, %v757
      %v759 = vpop.f32.mrf.mxu0
      %v760 = vadd.f32 0.0, %v759
      %761 = vmatmul.bf16.gmra.mxu0 %v728
      %v762 = vpop.f32.mrf.mxu0
      %v763 = vadd.f32 0.0, %v762
      %v764 = vpop.f32.mrf.mxu0
      %v765 = vadd.f32 0.0, %v764
      %766 = vmatmul.bf16.gmra.mxu0 %v731
      %v767 = vpop.f32.mrf.mxu0
      %v768 = vadd.f32 0.0, %v767
      %v769 = vpop.f32.mrf.mxu0
      %v770 = vadd.f32 0.0, %v769
      %771 = vmatmul.bf16.gmra.mxu0 %v734
      %v772 = vpop.f32.mrf.mxu0
      %v773 = vadd.f32 0.0, %v772
      %v774 = vpop.f32.mrf.mxu0
      %v775 = vadd.f32 0.0, %v774
      %776 = vmatmul.bf16.gmra.mxu0 %v737
      %v777 = vpop.f32.mrf.mxu0
      %v778 = vadd.f32 0.0, %v777
      %v779 = vpop.f32.mrf.mxu0
      %v780 = vadd.f32 0.0, %v779
      %781 = vmatmul.bf16.gmra.mxu0 %v740
      %v782 = vpop.f32.mrf.mxu0
      %v783 = vadd.f32 0.0, %v782
      %v784 = vpop.f32.mrf.mxu0
      %v785 = vadd.f32 0.0, %v784
      %786 = vmatmul.bf16.gmra.mxu0 %v743
      %v787 = vpop.f32.mrf.mxu0
      %v788 = vadd.f32 0.0, %v787
      %v789 = vpop.f32.mrf.mxu0
      %v790 = vadd.f32 0.0, %v789
      %791 = vmatmul.bf16.gmra.mxu0 %v746
      %v792 = vpop.f32.mrf.mxu0
      %v793 = vadd.f32 0.0, %v792
      %v794 = vpop.f32.mrf.mxu0
      %v795 = vadd.f32 0.0, %v794
      %796 = vdwg.mxu0
      %v797 = vadd.f32 %v645, %v758
      %v798 = vadd.f32 %v647, %v760
      %v799 = vadd.f32 %v650, %v763
      %v800 = vadd.f32 %v652, %v765
      %v801 = vadd.f32 %v655, %v768
      %v802 = vadd.f32 %v657, %v770
      %v803 = vadd.f32 %v660, %v773
      %v804 = vadd.f32 %v662, %v775
      %v805 = vadd.f32 %v665, %v778
      %v806 = vadd.f32 %v667, %v780
      %v807 = vadd.f32 %v670, %v783
      %v808 = vadd.f32 %v672, %v785
      %v809 = vadd.f32 %v675, %v788
      %v810 = vadd.f32 %v677, %v790
      %v811 = vadd.f32 %v680, %v793
      %v812 = vadd.f32 %v682, %v795
      %v813 = vld [vmem:[%s448] sm:$0xff]
      %v814 = vld [vmem:[%s448 + $0x8] sm:$0xff]
      %v815 = vld [vmem:[%s448 + $0x10] sm:$0xff]
      %v816 = vld [vmem:[%s448 + $0x18] sm:$0xff]
      %v817 = vld [vmem:[%s448 + $0x20] sm:$0xff]
      %v818 = vld [vmem:[%s448 + $0x28] sm:$0xff]
      %v819 = vld [vmem:[%s448 + $0x30] sm:$0xff]
      %v820 = vld [vmem:[%s448 + $0x38] sm:$0xff]
      %v821 = vld [vmem:[%s448 + $0x40] sm:$0xff]
      %v822 = vld [vmem:[%s448 + $0x48] sm:$0xff]
      %v823 = vld [vmem:[%s448 + $0x50] sm:$0xff]
      %v824 = vld [vmem:[%s448 + $0x58] sm:$0xff]
      %v825 = vld [vmem:[%s448 + $0x60] sm:$0xff]
      %v826 = vld [vmem:[%s448 + $0x68] sm:$0xff]
      %v827 = vld [vmem:[%s448 + $0x70] sm:$0xff]
      %v828 = vld [vmem:[%s448 + $0x78] sm:$0xff]
      %v829 = vpack.c.bf16 %v814, %v813
      %v830 = vpack.c.bf16 %v816, %v815
      %v831 = vpack.c.bf16 %v818, %v817
      %v832 = vpack.c.bf16 %v820, %v819
      %v833 = vpack.c.bf16 %v822, %v821
      %v834 = vpack.c.bf16 %v824, %v823
      %v835 = vpack.c.bf16 %v826, %v825
      %v836 = vpack.c.bf16 %v828, %v827
      %v837 = vld [vmem:[%s7] sm:$0xf]
      %v838 = vld [vmem:[%s7 + $0x4] sm:$0xf]
      %v839 = vld [vmem:[%s7 + $0x8] sm:$0xf]
      %v840 = vld [vmem:[%s7 + $0xc] sm:$0xf]
      %v845 = vunpack.c.l.b16 %v837
      %v846 = vunpack.c.l.b16 %v838
      %v847 = vunpack.c.l.b16 %v839
      %v848 = vunpack.c.l.b16 %v840
      %v849 = vpack.c.b16 %v846, %v845
      %v850 = vpack.c.b16 %v848, %v847
      %v854 = vsel %vm525, %v829, 0
      %v857 = vsel %vm525, %v830, 0
      %v860 = vsel %vm525, %v831, 0
      %v863 = vsel %vm525, %v832, 0
      %v866 = vsel %vm525, %v833, 0
      %v869 = vsel %vm525, %v834, 0
      %v872 = vsel %vm525, %v835, 0
      %v875 = vsel %vm525, %v836, 0
      %877 = vmatpush.bf16.msra.mxu0 0
      %878 = vmatpush.bf16.msra.mxu0 0
      %879 = vmatpush.bf16.msra.mxu0 0
      %880 = vmatpush.bf16.msra.mxu0 0
      %881 = vmatpush.bf16.msra.mxu0 0
      %882 = vmatpush.bf16.msra.mxu0 0
      %883 = vmatpush.bf16.msra.mxu0 %v850
      %884 = vmatpush.bf16.msra.mxu0 %v849
      %885 = vmatmul.bf16.gmra.mxu0 %v854
      %v886 = vpop.f32.mrf.mxu0
      %v887 = vadd.f32 0.0, %v886
      %v888 = vpop.f32.mrf.mxu0
      %v889 = vadd.f32 0.0, %v888
      %890 = vmatmul.bf16.gmra.mxu0 %v857
      %v891 = vpop.f32.mrf.mxu0
      %v892 = vadd.f32 0.0, %v891
      %v893 = vpop.f32.mrf.mxu0
      %v894 = vadd.f32 0.0, %v893
      %895 = vmatmul.bf16.gmra.mxu0 %v860
      %v896 = vpop.f32.mrf.mxu0
      %v897 = vadd.f32 0.0, %v896
      %v898 = vpop.f32.mrf.mxu0
      %v899 = vadd.f32 0.0, %v898
      %900 = vmatmul.bf16.gmra.mxu0 %v863
      %v901 = vpop.f32.mrf.mxu0
      %v902 = vadd.f32 0.0, %v901
      %v903 = vpop.f32.mrf.mxu0
      %v904 = vadd.f32 0.0, %v903
      %905 = vmatmul.bf16.gmra.mxu0 %v866
      %v906 = vpop.f32.mrf.mxu0
      %v907 = vadd.f32 0.0, %v906
      %v908 = vpop.f32.mrf.mxu0
      %v909 = vadd.f32 0.0, %v908
      %910 = vmatmul.bf16.gmra.mxu0 %v869
      %v911 = vpop.f32.mrf.mxu0
      %v912 = vadd.f32 0.0, %v911
      %v913 = vpop.f32.mrf.mxu0
      %v914 = vadd.f32 0.0, %v913
      %915 = vmatmul.bf16.gmra.mxu0 %v872
      %v916 = vpop.f32.mrf.mxu0
      %v917 = vadd.f32 0.0, %v916
      %v918 = vpop.f32.mrf.mxu0
      %v919 = vadd.f32 0.0, %v918
      %920 = vmatmul.bf16.gmra.mxu0 %v875
      %v921 = vpop.f32.mrf.mxu0
      %v922 = vadd.f32 0.0, %v921
      %v923 = vpop.f32.mrf.mxu0
      %v924 = vadd.f32 0.0, %v923
      %925 = vdwg.mxu0
      %v926 = vadd.f32 %v797, %v887
      %v927 = vadd.f32 %v798, %v889
      %v928 = vadd.f32 %v799, %v892
      %v929 = vadd.f32 %v800, %v894
      %v930 = vadd.f32 %v801, %v897
      %v931 = vadd.f32 %v802, %v899
      %v932 = vadd.f32 %v803, %v902
      %v933 = vadd.f32 %v804, %v904
      %v934 = vadd.f32 %v805, %v907
      %v935 = vadd.f32 %v806, %v909
      %v936 = vadd.f32 %v807, %v912
      %v937 = vadd.f32 %v808, %v914
      %v938 = vadd.f32 %v809, %v917
      %v939 = vadd.f32 %v810, %v919
      %v940 = vadd.f32 %v811, %v922
      %v941 = vadd.f32 %v812, %v924
      %v942 = vld [vmem:[%s8] sm:$0x1]
      %v944 = vperm.slane %v942, 0
      %v946 = vadd.f32 %v926, %v944
      %v947 = vadd.f32 %v927, %v944
      %v948 = vadd.f32 %v928, %v944
      %v949 = vadd.f32 %v929, %v944
      %v950 = vadd.f32 %v930, %v944
      %v951 = vadd.f32 %v931, %v944
      %v952 = vadd.f32 %v932, %v944
      %v953 = vadd.f32 %v933, %v944
      %v954 = vadd.f32 %v934, %v944
      %v955 = vadd.f32 %v935, %v944
      %v956 = vadd.f32 %v936, %v944
      %v957 = vadd.f32 %v937, %v944
      %v958 = vadd.f32 %v938, %v944
      %v959 = vadd.f32 %v939, %v944
      %v960 = vadd.f32 %v940, %v944
      %v961 = vadd.f32 %v941, %v944
      %v962 = vmax.f32 %v946, 0.0
      %v963 = vmax.f32 %v947, 0.0
      %v964 = vmax.f32 %v948, 0.0
      %v965 = vmax.f32 %v949, 0.0
      %v966 = vmax.f32 %v950, 0.0
      %v967 = vmax.f32 %v951, 0.0
      %v968 = vmax.f32 %v952, 0.0
      %v969 = vmax.f32 %v953, 0.0
      %v970 = vmax.f32 %v954, 0.0
      %v971 = vmax.f32 %v955, 0.0
      %v972 = vmax.f32 %v956, 0.0
      %v973 = vmax.f32 %v957, 0.0
      %v974 = vmax.f32 %v958, 0.0
      %v975 = vmax.f32 %v959, 0.0
      %v976 = vmax.f32 %v960, 0.0
      %v977 = vmax.f32 %v961, 0.0
      %v978 = vpack.c.bf16 %v963, %v962
      %v979 = vpack.c.bf16 %v965, %v964
      %v980 = vpack.c.bf16 %v967, %v966
      %v981 = vpack.c.bf16 %v969, %v968
      %v982 = vpack.c.bf16 %v971, %v970
      %v983 = vpack.c.bf16 %v973, %v972
      %v984 = vpack.c.bf16 %v975, %v974
      %v985 = vpack.c.bf16 %v977, %v976
      %v986 = vld [vmem:[%s9] sm:$0xf]
      %v987 = vld [vmem:[%s9 + $0x4] sm:$0xf]
      %v988 = vld [vmem:[%s9 + $0x8] sm:$0xf]
      %v989 = vld [vmem:[%s9 + $0xc] sm:$0xf]
      %v990 = vld [vmem:[%s9 + $0x10] sm:$0xf]
      %v991 = vld [vmem:[%s9 + $0x14] sm:$0xf]
      %v992 = vld [vmem:[%s9 + $0x18] sm:$0xf]
      %v993 = vld [vmem:[%s9 + $0x1c] sm:$0xf]
      %v994 = vld [vmem:[%s9 + $0x20] sm:$0xf]
      %v995 = vld [vmem:[%s9 + $0x24] sm:$0xf]
      %v996 = vld [vmem:[%s9 + $0x28] sm:$0xf]
      %v997 = vld [vmem:[%s9 + $0x2c] sm:$0xf]
      %v998 = vld [vmem:[%s9 + $0x30] sm:$0xf]
      %v999 = vld [vmem:[%s9 + $0x34] sm:$0xf]
      %v1000 = vld [vmem:[%s9 + $0x38] sm:$0xf]
      %v1001 = vld [vmem:[%s9 + $0x3c] sm:$0xf]
      %v1002 = vld [vmem:[%s10] sm:$0x1]
      %v1004 = vperm.slane %v1002, 0
      %v1022 = vunpack.c.l.b16 %v986
      %v1023 = vunpack.c.l.b16 %v987
      %v1024 = vunpack.c.l.b16 %v988
      %v1025 = vunpack.c.l.b16 %v989
      %v1026 = vunpack.c.l.b16 %v990
      %v1027 = vunpack.c.l.b16 %v991
      %v1028 = vunpack.c.l.b16 %v992
      %v1029 = vunpack.c.l.b16 %v993
      %v1030 = vunpack.c.l.b16 %v994
      %v1031 = vunpack.c.l.b16 %v995
      %v1032 = vunpack.c.l.b16 %v996
      %v1033 = vunpack.c.l.b16 %v997
      %v1034 = vunpack.c.l.b16 %v998
      %v1035 = vunpack.c.l.b16 %v999
      %v1036 = vunpack.c.l.b16 %v1000
      %v1037 = vunpack.c.l.b16 %v1001
      %v1038 = vpack.c.b16 %v1023, %v1022
      %v1039 = vpack.c.b16 %v1025, %v1024
      %v1040 = vpack.c.b16 %v1027, %v1026
      %v1041 = vpack.c.b16 %v1029, %v1028
      %v1042 = vpack.c.b16 %v1031, %v1030
      %v1043 = vpack.c.b16 %v1033, %v1032
      %v1044 = vpack.c.b16 %v1035, %v1034
      %v1045 = vpack.c.b16 %v1037, %v1036
      %1054 = vmatpush.bf16.msra.mxu0 %v1045
      %1055 = vmatpush.bf16.msra.mxu0 %v1044
      %1056 = vmatpush.bf16.msra.mxu0 %v1043
      %1057 = vmatpush.bf16.msra.mxu0 %v1042
      %1058 = vmatpush.bf16.msra.mxu0 %v1041
      %1059 = vmatpush.bf16.msra.mxu0 %v1040
      %1060 = vmatpush.bf16.msra.mxu0 %v1039
      %1061 = vmatpush.bf16.msra.mxu0 %v1038
      %1062 = vmatmul.bf16.gmra.mxu0 %v978
      %v1063 = vpop.f32.mrf.mxu0
      %v1064 = vadd.f32 %v1004, %v1063
      %v1065 = vpop.f32.mrf.mxu0
      %v1066 = vadd.f32 %v1004, %v1065
      %1067 = vmatmul.bf16.gmra.mxu0 %v979
      %v1068 = vpop.f32.mrf.mxu0
      %v1069 = vadd.f32 %v1004, %v1068
      %v1070 = vpop.f32.mrf.mxu0
      %v1071 = vadd.f32 %v1004, %v1070
      %1072 = vmatmul.bf16.gmra.mxu0 %v980
      %v1073 = vpop.f32.mrf.mxu0
      %v1074 = vadd.f32 %v1004, %v1073
      %v1075 = vpop.f32.mrf.mxu0
      %v1076 = vadd.f32 %v1004, %v1075
      %1077 = vmatmul.bf16.gmra.mxu0 %v981
      %v1078 = vpop.f32.mrf.mxu0
      %v1079 = vadd.f32 %v1004, %v1078
      %v1080 = vpop.f32.mrf.mxu0
      %v1081 = vadd.f32 %v1004, %v1080
      %1082 = vmatmul.bf16.gmra.mxu0 %v982
      %v1083 = vpop.f32.mrf.mxu0
      %v1084 = vadd.f32 %v1004, %v1083
      %v1085 = vpop.f32.mrf.mxu0
      %v1086 = vadd.f32 %v1004, %v1085
      %1087 = vmatmul.bf16.gmra.mxu0 %v983
      %v1088 = vpop.f32.mrf.mxu0
      %v1089 = vadd.f32 %v1004, %v1088
      %v1090 = vpop.f32.mrf.mxu0
      %v1091 = vadd.f32 %v1004, %v1090
      %1092 = vmatmul.bf16.gmra.mxu0 %v984
      %v1093 = vpop.f32.mrf.mxu0
      %v1094 = vadd.f32 %v1004, %v1093
      %v1095 = vpop.f32.mrf.mxu0
      %v1096 = vadd.f32 %v1004, %v1095
      %1097 = vmatmul.bf16.gmra.mxu0 %v985
      %v1098 = vpop.f32.mrf.mxu0
      %v1099 = vadd.f32 %v1004, %v1098
      %v1100 = vpop.f32.mrf.mxu0
      %v1101 = vadd.f32 %v1004, %v1100
      %1102 = vdwg.mxu0
      %1103 = vst [vmem:[%s454] sm:$0xff] %v1064
      %1104 = vst [vmem:[%s454 + $0x8] sm:$0xff] %v1066
      %1105 = vst [vmem:[%s454 + $0x10] sm:$0xff] %v1069
      %1106 = vst [vmem:[%s454 + $0x18] sm:$0xff] %v1071
      %1107 = vst [vmem:[%s454 + $0x20] sm:$0xff] %v1074
      %1108 = vst [vmem:[%s454 + $0x28] sm:$0xff] %v1076
      %1109 = vst [vmem:[%s454 + $0x30] sm:$0xff] %v1079
      %1110 = vst [vmem:[%s454 + $0x38] sm:$0xff] %v1081
      %1111 = vst [vmem:[%s454 + $0x40] sm:$0xff] %v1084
      %1112 = vst [vmem:[%s454 + $0x48] sm:$0xff] %v1086
      %1113 = vst [vmem:[%s454 + $0x50] sm:$0xff] %v1089
      %1114 = vst [vmem:[%s454 + $0x58] sm:$0xff] %v1091
      %1115 = vst [vmem:[%s454 + $0x60] sm:$0xff] %v1094
      %1116 = vst [vmem:[%s454 + $0x68] sm:$0xff] %v1096
      %1117 = vst [vmem:[%s454 + $0x70] sm:$0xff] %v1099
      %1118 = vst [vmem:[%s454 + $0x78] sm:$0xff] %v1101
      %s1119 = smul.u32 16, %s22
      %p1120 = scmp.lt.s32.totalorder %s1119, 31
      %s1121 = scalar_select %p1120, %s1119, 31
      %s1122 = smul.addr %s1121, 8
      %s1123 = scalar_lea.vmem %s11, %s1122
      // Predicated region
      $region65: #{nonlinear_generator_forward.1} parent=63 // pred_check
        %p1124 = pneg %p291
      $region66: #{nonlinear_generator_forward.1} parent=63 // pred_check_branch
        %1126 = sbr.rel (%p1124) target = $region68
      $region67: #{nonlinear_generator_forward.1} parent=63 // pred_region
        %s1127 = smul.u32 16, %s22
      $region68: #{nonlinear_generator_forward.1} parent=63 // pred_fallthru
        _
    $region64: #{nonlinear_generator_forward.1} parent=5 // pred_fallthru
      _
    %p1128 = scmp.le.s32.totalorder 2, %s17
    // Predicated region
    $region69: #{nonlinear_generator_forward.1} parent=5 // pred_check
      %p1129 = pneg %p1128
    $region70: #{nonlinear_generator_forward.1} parent=5 // pred_check_branch
      %1131 = sbr.rel (%p1129) target = $region72
    $region71: #{nonlinear_generator_forward.1} parent=5 // pred_region
      %s1132 = ssub.s32 %s17, 2
      // Predicated region
      $region73: #{nonlinear_generator_forward.1} parent=71 // pred_check
        %p1133 = pneg %p297
      $region74: #{nonlinear_generator_forward.1} parent=71 // pred_check_branch
        %1135 = sbr.rel (%p1133) target = $region76
      $region75: #{nonlinear_generator_forward.1} parent=71 // pred_region
        %s1136 = smul.u32 16, %s23
        %p1137 = scmp.lt.s32.totalorder %s1136, 31
        %s1138 = scalar_select %p1137, %s1136, 31
        %s1139 = smul.addr %s1138, 8
        %s1140 = scalar_lea.vmem %s11, %s1139
      $region76: #{nonlinear_generator_forward.1} parent=71 // pred_fallthru
        _
    $region72: #{nonlinear_generator_forward.1} parent=5 // pred_fallthru
      _
  $region6: #{nonlinear_generator_forward.1} parent=0 // loop_footer
    %s21 = sadd.s32 1, %s17
  $region7: #{nonlinear_generator_forward.1} parent=0 // loop_footer_branch
    %16 = sbr.rel target = $region3
  $region8: #{nonlinear_generator_forward.1} parent=0 // loop_exit
    _

</llo_original>
